<compile_context>
chip_gen: v5e
topology: v5e:2x2
jax: 0.10.0
libtpu: 0.0.40
codegen_flags: <defaults>
</compile_context>

<pallas_src>
import functools

import jax
import jax.numpy as jnp
from jax.experimental import pallas as pl
from jax.experimental.pallas import tpu as pltpu

INPUT_SIZE = 784
HIDDEN = 50
NUM_CLASSES = 10

# Lane/MXU-friendly padded sizes (padding is zeros -> math unchanged).
HIDDEN_PAD = 128    # 50 -> 128: full-lane bias row, full MXU width for fc1
OUT_PAD = 128       # 10 -> 128: padded class columns for the fc2 matmul only


def mlp_kernel(x_ref, w1_ref, w2_ref, bias_ref, o_ref):
    # x_ref:    (tb, 784)  f32/bf16   batch tile (streamed)
    # w1_ref:   (784, 128) bf16       zero-padded hidden columns (resident)
    # w2_ref:   (128, 128) bf16       zero-padded hidden rows / class cols
    # bias_ref: (2, 128)   f32        row 0 = b1 (padded), row 1 = b2 (padded)
    # o_ref:    (tb, 10)   f32        un-padded output block (masked store)
    bias = bias_ref[...]
    # Cast the streamed activations in-kernel (VPU has slack; hides under DMA).
    x = x_ref[...].astype(jnp.bfloat16)
    # fc1 on the MXU, f32 accumulation; bias + ReLU epilogue in f32.
    h = jnp.dot(x, w1_ref[...], preferred_element_type=jnp.float32)
    h = jnp.maximum(h + bias[0:1, :], 0.0)
    # fc2 on the MXU (bf16 inputs, f32 accumulation).
    out = jnp.dot(h.astype(jnp.bfloat16), w2_ref[...],
                  preferred_element_type=jnp.float32)
    # Store only the 10 real class columns (no padded writeback / no post-slice).
    o_ref[...] = out[:, :NUM_CLASSES] + bias[1:2, :NUM_CLASSES]


def pack_params(w1, b1, w2, b2):
    """One-time repack: zero-pad to lane-friendly shapes, cast weights to bf16,
    and fuse both biases into a single (2, 128) f32 buffer."""
    w1p = jnp.zeros((INPUT_SIZE, HIDDEN_PAD), jnp.float32).at[:, :HIDDEN].set(w1)
    w2p = jnp.zeros((HIDDEN_PAD, OUT_PAD), jnp.float32).at[:HIDDEN, :NUM_CLASSES].set(w2)
    bias = jnp.zeros((2, OUT_PAD), jnp.float32)
    bias = bias.at[0, :HIDDEN].set(b1)
    bias = bias.at[1, :NUM_CLASSES].set(b2)
    return w1p.astype(jnp.bfloat16), w2p.astype(jnp.bfloat16), bias


def _pick_tb(batch, block_b):
    """Batch tile: multiple of 8, <= block_b, and >= 2 grid steps when possible
    so both v7x TensorCores receive tiles under dimension_semantics=parallel."""
    if batch <= 8:
        return batch                       # single full-extent block
    half = -(-batch // 2)                  # ceil(batch / 2)
    half = ((half + 7) // 8) * 8           # round up to a multiple of 8
    tb = min(block_b, half)
    return max(8, (tb // 8) * 8)


@functools.partial(jax.jit, static_argnames=("block_b",))
def neural_network_forward(x, w1p, w2p, bias, *, block_b=512):
    """x: (B, 784) float32 or bfloat16. Returns (B, 10) float32."""
    B = x.shape[0]
    tb = _pick_tb(B, block_b)
    grid = (pl.cdiv(B, tb),)

    x_bytes = jnp.dtype(x.dtype).itemsize
    flops = 2 * B * INPUT_SIZE * HIDDEN_PAD + 2 * B * HIDDEN_PAD * OUT_PAD
    bytes_accessed = (B * INPUT_SIZE * x_bytes          # x (native dtype)
                      + INPUT_SIZE * HIDDEN_PAD * 2     # w1 (bf16)
                      + HIDDEN_PAD * OUT_PAD * 2        # w2 (bf16)
                      + 2 * OUT_PAD * 4                 # bias (f32)
                      + B * NUM_CLASSES * 4)            # out (f32, un-padded)

    return pl.pallas_call(
        mlp_kernel,
        out_shape=jax.ShapeDtypeStruct((B, NUM_CLASSES), jnp.float32),
        grid_spec=pltpu.PrefetchScalarGridSpec(
            num_scalar_prefetch=0,
            grid=grid,
            in_specs=[
                # batch-tiled activations (pipelined DMA, native dtype)
                pl.BlockSpec((tb, INPUT_SIZE), lambda i: (i, 0)),
                # weights / biases: constant block index -> VMEM-resident
                pl.BlockSpec((INPUT_SIZE, HIDDEN_PAD), lambda i: (0, 0)),
                pl.BlockSpec((HIDDEN_PAD, OUT_PAD), lambda i: (0, 0)),
                pl.BlockSpec((2, OUT_PAD), lambda i: (0, 0)),
            ],
            # last dim (10) equals the full array dim -> legal un-padded block
            out_specs=pl.BlockSpec((tb, NUM_CLASSES), lambda i: (i, 0)),
        ),
        compiler_params=pltpu.CompilerParams(
            # batch tiles are independent -> shard across TCs on v7x
            dimension_semantics=("parallel",),
            vmem_limit_bytes=32 * 1024 * 1024,
        ),
        cost_estimate=pl.CostEstimate(
            flops=flops, transcendentals=0, bytes_accessed=bytes_accessed),
    )(x, w1p, w2p, bias)


def init_params(key):
    """Deterministic init mimicking PyTorch nn.Linear (uniform +/- 1/sqrt(fan_in)).
    Weights stored as (in, out), i.e. the transpose of PyTorch's (out, in)."""
    k1, k2, k3, k4 = jax.random.split(key, 4)
    bound1 = 1.0 / jnp.sqrt(INPUT_SIZE)
    bound2 = 1.0 / jnp.sqrt(HIDDEN)
    w1 = jax.random.uniform(k1, (INPUT_SIZE, HIDDEN), jnp.float32, -bound1, bound1)
    b1 = jax.random.uniform(k2, (HIDDEN,), jnp.float32, -bound1, bound1)
    w2 = jax.random.uniform(k3, (HIDDEN, NUM_CLASSES), jnp.float32, -bound2, bound2)
    b2 = jax.random.uniform(k4, (NUM_CLASSES,), jnp.float32, -bound2, bound2)
    return w1, b1, w2, b2


def reference_forward_bf16(x, w1, b1, w2, b2):
    """Mirrors the kernel's arithmetic (bf16 matmul inputs, f32 accumulation)."""
    h = jnp.dot(x.astype(jnp.bfloat16), w1.astype(jnp.bfloat16),
                preferred_element_type=jnp.float32) + b1
    h = jnp.maximum(h, 0.0)
    return jnp.dot(h.astype(jnp.bfloat16), w2.astype(jnp.bfloat16),
                   preferred_element_type=jnp.float32) + b2


def reference_forward_f32(x, w1, b1, w2, b2):
    """Original full-precision semantics (PyTorch module in f32)."""
    h = jnp.maximum(x @ w1 + b1, 0.0)
    return h @ w2 + b2


if __name__ == "__main__":
    key = jax.random.PRNGKey(0)
    kx, kp = jax.random.split(key)

    batch = 16                            # small test batch -> two tiles of 8
    x = jax.random.normal(kx, (batch, INPUT_SIZE), dtype=jnp.float32)
    w1, b1, w2, b2 = init_params(kp)
    w1p, w2p, bias = pack_params(w1, b1, w2, b2)

    out = neural_network_forward(x, w1p, w2p, bias, block_b=512)
    out = jax.block_until_ready(out)

    assert out.shape == (batch, NUM_CLASSES)
    ref_bf16 = reference_forward_bf16(x, w1, b1, w2, b2)
    assert jnp.allclose(out, ref_bf16, atol=2e-3, rtol=2e-3), \
        "mismatch vs bf16-mirrored reference"
    ref_f32 = reference_forward_f32(x, w1, b1, w2, b2)
    assert jnp.allclose(out, ref_f32, atol=5e-2, rtol=5e-2), \
        "mismatch vs f32 reference"

    print("KERNEL_OK")
</pallas_src>

<mosaic_0001>
module attributes {stable_mosaic.version = 11 : i64} {
  func.func @mlp_kernel(%arg0: i32, %arg1: memref<8x784xf32, #tpu.memory_space<vmem>>, %arg2: memref<784x128xbf16, #tpu.memory_space<vmem>>, %arg3: memref<128x128xbf16, #tpu.memory_space<vmem>>, %arg4: memref<2x128xf32, #tpu.memory_space<vmem>>, %arg5: memref<8x10xf32, #tpu.memory_space<vmem>>) attributes {dimension_semantics = [#tpu.dimension_semantics<parallel>], iteration_bounds = array<i64: 2>, scalar_prefetch = 0 : i64, scratch_operands = 0 : i64, tpu.core_type = #tpu.core_type<tc>, window_params = [{transform_indices = @transform_0, window_bounds = array<i64: 8, 784>}, {pipeline_mode = #tpu.pipeline_mode<synchronous>, transform_indices = @transform_1, window_bounds = array<i64: 784, 128>}, {pipeline_mode = #tpu.pipeline_mode<synchronous>, transform_indices = @transform_2, window_bounds = array<i64: 128, 128>}, {pipeline_mode = #tpu.pipeline_mode<synchronous>, transform_indices = @transform_3, window_bounds = array<i64: 2, 128>}, {transform_indices = @transform_4, window_bounds = array<i64: 8, 10>}]} {
    %c0 = arith.constant 0 : index
    %c0_0 = arith.constant 0 : index
    %0 = vector.load %arg4[%c0, %c0_0] : memref<2x128xf32, #tpu.memory_space<vmem>>, vector<2x128xf32>
    %c0_1 = arith.constant 0 : index
    %c0_2 = arith.constant 0 : index
    %1 = vector.load %arg1[%c0_1, %c0_2] : memref<8x784xf32, #tpu.memory_space<vmem>>, vector<8x784xf32>
    %2 = arith.truncf %1 : vector<8x784xf32> to vector<8x784xbf16>
    %c0_3 = arith.constant 0 : index
    %c0_4 = arith.constant 0 : index
    %3 = vector.load %arg2[%c0_3, %c0_4] : memref<784x128xbf16, #tpu.memory_space<vmem>>, vector<784x128xbf16>
    %cst = arith.constant dense<0.000000e+00> : vector<8x128xf32>
    %4 = tpu.matmul %2, %3, %cst {dimension_numbers = #tpu.dot_dimension_numbers<[1], [0], [0], [1], [0, 0, 1, 1], [], []>} : vector<8x784xbf16>, vector<784x128xbf16>, vector<8x128xf32> -> vector<8x128xf32>
    %5 = vector.extract_strided_slice %0 {offsets = [0, 0], sizes = [1, 128], strides = [1, 1]} : vector<2x128xf32> to vector<1x128xf32>
    %6 = vector.broadcast %5 : vector<1x128xf32> to vector<8x128xf32>
    %7 = arith.addf %4, %6 : vector<8x128xf32>
    %cst_5 = arith.constant 0.000000e+00 : f32
    %8 = vector.broadcast %cst_5 : f32 to vector<8x128xf32>
    %9 = arith.maximumf %7, %8 : vector<8x128xf32>
    %10 = arith.truncf %9 : vector<8x128xf32> to vector<8x128xbf16>
    %c0_6 = arith.constant 0 : index
    %c0_7 = arith.constant 0 : index
    %11 = vector.load %arg3[%c0_6, %c0_7] : memref<128x128xbf16, #tpu.memory_space<vmem>>, vector<128x128xbf16>
    %cst_8 = arith.constant dense<0.000000e+00> : vector<8x128xf32>
    %12 = tpu.matmul %10, %11, %cst_8 {dimension_numbers = #tpu.dot_dimension_numbers<[1], [0], [0], [1], [0, 0, 1, 1], [], []>} : vector<8x128xbf16>, vector<128x128xbf16>, vector<8x128xf32> -> vector<8x128xf32>
    %13 = vector.extract_strided_slice %12 {offsets = [0, 0], sizes = [8, 10], strides = [1, 1]} : vector<8x128xf32> to vector<8x10xf32>
    %14 = vector.extract_strided_slice %0 {offsets = [1, 0], sizes = [1, 10], strides = [1, 1]} : vector<2x128xf32> to vector<1x10xf32>
    %15 = vector.broadcast %14 : vector<1x10xf32> to vector<8x10xf32>
    %16 = arith.addf %13, %15 : vector<8x10xf32>
    %c0_9 = arith.constant 0 : index
    %c0_10 = arith.constant 0 : index
    %17 = vector.load %arg5[%c0_9, %c0_10] : memref<8x10xf32, #tpu.memory_space<vmem>>, vector<8x10xf32>
    tpu.vector_store %arg5[%c0_9, %c0_10], %16 {strides = array<i32>} : memref<8x10xf32, #tpu.memory_space<vmem>>, vector<8x10xf32>,
    return
  }
  func.func @transform_0(%arg0: i32) -> (i32, i32) {
    %c0_i32 = arith.constant 0 : i32
    %c0_i32_0 = arith.constant 0 : i32
    return %arg0, %c0_i32 : i32, i32
  }
  func.func @transform_1(%arg0: i32) -> (i32, i32) {
    %c0_i32 = arith.constant 0 : i32
    %c0_i32_0 = arith.constant 0 : i32
    %c0_i32_1 = arith.constant 0 : i32
    return %c0_i32, %c0_i32_0 : i32, i32
  }
  func.func @transform_2(%arg0: i32) -> (i32, i32) {
    %c0_i32 = arith.constant 0 : i32
    %c0_i32_0 = arith.constant 0 : i32
    %c0_i32_1 = arith.constant 0 : i32
    return %c0_i32, %c0_i32_0 : i32, i32
  }
  func.func @transform_3(%arg0: i32) -> (i32, i32) {
    %c0_i32 = arith.constant 0 : i32
    %c0_i32_0 = arith.constant 0 : i32
    %c0_i32_1 = arith.constant 0 : i32
    return %c0_i32, %c0_i32_0 : i32, i32
  }
  func.func @transform_4(%arg0: i32) -> (i32, i32) {
    %c0_i32 = arith.constant 0 : i32
    %c0_i32_0 = arith.constant 0 : i32
    return %arg0, %c0_i32 : i32, i32
  }
}

</mosaic_0001>

<llo_original>
// kernel: neural_network_forward.1
$region0: #{neural_network_forward.1}
  #allocation0 [shape = 'u32[]', space=smem, size = 0x4, offset = 0x4, fixed_abs, tag = 'smem constant byte address 0x4 - core index']
  #allocation1 [shape = 'u32[72,128]{1,0:T(1,128)}', space=vmem, size = 0x9000, scoped, tag = 'internal scratch']
  %s0 = inlined_call_operand.hbm [shape: f32[16,784], index: 0, kind: input, shape index: {}]
  %s1 = inlined_call_operand.hbm [shape: bf16[784,128], index: 1, kind: input, shape index: {}]
  %s2 = inlined_call_operand.hbm [shape: bf16[128,128], index: 2, kind: input, shape index: {}]
  %s3 = inlined_call_operand.vmem [shape: f32[2,128], index: 3, kind: input, shape index: {}]
  %s4 = inlined_call_operand.hbm [shape: f32[16,10], index: 4, kind: output, shape index: {}]
  %s5 = sld [smem:[#allocation0]]
  $region61: #{neural_network_forward.1} parent=0
    _
  %s7 = ssub.s32 1, %s5
  %s8 = scalar_select 0, %s7, %s5
  $region1: #{neural_network_forward.1} parent=0
    #allocation2 [shape = 'u8[57344]{0}', space=vmem, size = 0xe000, scoped, tag = 'input window, operand 0']
    #allocation3 [shape = 's32[2]{0}', space=sflag, size = 0x8, scoped, tag = 'scoped memory for neural_network_forward.1']
    #allocation4 [shape = 's32[2]{0}', space=sflag, size = 0x8, scoped, tag = 'scoped memory for neural_network_forward.1']
    #allocation5 [shape = 'u8[200704]{0}', space=vmem, size = 0x31000, scoped, tag = 'input window, operand 1, single buffered']
    #allocation6 [shape = 's32[1]{0}', space=sflag, size = 0x4, scoped, tag = 'scoped memory for neural_network_forward.1']
    #allocation7 [shape = 'u8[32768]{0}', space=vmem, size = 0x8000, scoped, tag = 'input window, operand 2, single buffered']
    #allocation8 [shape = 'u8[8192]{0}', space=vmem, size = 0x2000, scoped, tag = 'output window, operand 0']
    %9 = vsyncpa [#allocation3], 0
    %s10 = scalar_lea.sflag [#allocation3], 1
    %11 = vsyncpa %s10, 0
    %12 = vsyncpa [#allocation6], 0
    %13 = vsyncpa [#allocation4], 0
    %s14 = scalar_lea.sflag [#allocation4], 1
    %15 = vsyncpa %s14, 0
    loop: start=0, step=1, limit=4
    $region2: #{neural_network_forward.1} parent=1 // loop_pre_header
      _
    $region3: #{neural_network_forward.1} parent=1 // loop_header
      %s17 = sphi 0, %s21
      %p18 = scmp.ge.s32.totalorder %s17, 4
      %s27 = sphi 0, %s29
      %s30 = sphi 0, %s27
      %s31 = sphi 0, %s30
      %s47 = sphi 0, %s31
      %s51 = sphi 0, %s51
      %s53 = sphi 0, %s51
      %s54 = sphi 0, %s53
      %s68 = sphi 0, %s54
      %s72 = sphi 0, %s72
      %s74 = sphi 0, %s72
      %s75 = sphi 0, %s74
      %s89 = sphi 0, %s75
      %s93 = sphi 0, %s93
      %s95 = sphi 0, %s93
      %s96 = sphi 0, %s95
      %s110 = sphi 0, %s96
      %s116 = sphi 0, %s118
      %s119 = sphi 0, %s116
      %s120 = sphi 0, %s119
      %s136 = sphi 0, %s120
    $region4: #{neural_network_forward.1} parent=1 // loop_header_branch
      %20 = sbr.rel (%p18) target = $region8
    $region5: #{neural_network_forward.1} parent=1 // loop_body
      %s22 = ssub.s32 %s17, 1
      %s23 = ssub.s32 %s17, 2
      %s24 = sadd.s32 %s17, 1
      %s25 = ssub.s32 %s17, %s24
      %p26 = scmp.eq.s32.totalorder %s25, 0
      %s28 = sadd.s32 %s27, 1
      %s29 = scalar_select %p26, %s27, %s28
      %p32 = pneg %p26
      %p33 = scmp.eq.s32.totalorder %s17, 1
      %p34 = por %p32, %p33
      %p35 = scmp.ne.s32.totalorder %s27, %s30
      %p36 = scmp.eq.s32.totalorder %s17, 0
      %p37 = por %p35, %p36
      %p38 = scmp.ne.s32.totalorder %s27, %s30
      %p39 = scmp.eq.s32.totalorder %s22, 1
      %p40 = por %p38, %p39
      %p41 = scmp.ne.s32.totalorder %s30, %s31
      %p42 = scmp.eq.s32.totalorder %s22, 0
      %p43 = por %p41, %p42
      %p44 = scmp.ne.s32.totalorder %s30, %s31
      %p45 = scmp.eq.s32.totalorder %s23, 1
      %p46 = por %p44, %p45
      %p48 = scmp.ne.s32.totalorder %s31, %s47
      %p49 = scmp.eq.s32.totalorder %s23, 0
      %p50 = por %p48, %p49
      %s52 = sadd.s32 %s51, 1
      %p55 = scmp.eq.s32.totalorder %s17, 1
      %p56 = scmp.ne.s32.totalorder %s51, %s53
      %p57 = scmp.eq.s32.totalorder %s17, 0
      %p58 = por %p56, %p57
      %p59 = scmp.ne.s32.totalorder %s51, %s53
      %p60 = scmp.eq.s32.totalorder %s22, 1
      %p61 = por %p59, %p60
      %p62 = scmp.ne.s32.totalorder %s53, %s54
      %p63 = scmp.eq.s32.totalorder %s22, 0
      %p64 = por %p62, %p63
      %p65 = scmp.ne.s32.totalorder %s53, %s54
      %p66 = scmp.eq.s32.totalorder %s23, 1
      %p67 = por %p65, %p66
      %p69 = scmp.ne.s32.totalorder %s54, %s68
      %p70 = scmp.eq.s32.totalorder %s23, 0
      %p71 = por %p69, %p70
      %s73 = sadd.s32 %s72, 1
      %p76 = scmp.eq.s32.totalorder %s17, 1
      %p77 = scmp.ne.s32.totalorder %s72, %s74
      %p78 = scmp.eq.s32.totalorder %s17, 0
      %p79 = por %p77, %p78
      %p80 = scmp.ne.s32.totalorder %s72, %s74
      %p81 = scmp.eq.s32.totalorder %s22, 1
      %p82 = por %p80, %p81
      %p83 = scmp.ne.s32.totalorder %s74, %s75
      %p84 = scmp.eq.s32.totalorder %s22, 0
      %p85 = por %p83, %p84
      %p86 = scmp.ne.s32.totalorder %s74, %s75
      %p87 = scmp.eq.s32.totalorder %s23, 1
      %p88 = por %p86, %p87
      %p90 = scmp.ne.s32.totalorder %s75, %s89
      %p91 = scmp.eq.s32.totalorder %s23, 0
      %p92 = por %p90, %p91
      %s94 = sadd.s32 %s93, 1
      %p97 = scmp.eq.s32.totalorder %s17, 1
      %p98 = scmp.ne.s32.totalorder %s93, %s95
      %p99 = scmp.eq.s32.totalorder %s17, 0
      %p100 = por %p98, %p99
      %p101 = scmp.ne.s32.totalorder %s93, %s95
      %p102 = scmp.eq.s32.totalorder %s22, 1
      %p103 = por %p101, %p102
      %p104 = scmp.ne.s32.totalorder %s95, %s96
      %p105 = scmp.eq.s32.totalorder %s22, 0
      %p106 = por %p104, %p105
      %p107 = scmp.ne.s32.totalorder %s95, %s96
      %p108 = scmp.eq.s32.totalorder %s23, 1
      %p109 = por %p107, %p108
      %p111 = scmp.ne.s32.totalorder %s96, %s110
      %p112 = scmp.eq.s32.totalorder %s23, 0
      %p113 = por %p111, %p112
      %s114 = ssub.s32 %s17, %s24
      %p115 = scmp.eq.s32.totalorder %s114, 0
      %s117 = sadd.s32 %s116, 1
      %s118 = scalar_select %p115, %s116, %s117
      %p121 = pneg %p115
      %p122 = scmp.eq.s32.totalorder %s17, 1
      %p123 = por %p121, %p122
      %p124 = scmp.ne.s32.totalorder %s116, %s119
      %p125 = scmp.eq.s32.totalorder %s17, 0
      %p126 = por %p124, %p125
      %p127 = scmp.ne.s32.totalorder %s116, %s119
      %p128 = scmp.eq.s32.totalorder %s22, 1
      %p129 = por %p127, %p128
      %p130 = scmp.ne.s32.totalorder %s119, %s120
      %p131 = scmp.eq.s32.totalorder %s22, 0
      %p132 = por %p130, %p131
      %p133 = scmp.ne.s32.totalorder %s119, %s120
      %p134 = scmp.eq.s32.totalorder %s23, 1
      %p135 = por %p133, %p134
      %p137 = scmp.ne.s32.totalorder %s120, %s136
      %p138 = scmp.eq.s32.totalorder %s23, 0
      %p139 = por %p137, %p138
      %p140 = scmp.le.s32.totalorder 1, %s17
      %p141 = scmp.lt.s32.totalorder %s17, 3
      %p142 = pnand %p140, %p141
      %p143 = pneg %p142
      // Predicated region
      $region9: #{neural_network_forward.1} parent=5 // pred_check
        _
      $region10: #{neural_network_forward.1} parent=5 // pred_check_branch
        %145 = sbr.rel (%p142) target = $region12
      $region11: #{neural_network_forward.1} parent=5 // pred_region
        %s146 = ssub.s32 %s17, 1
        // Predicated region
        $region13: #{neural_network_forward.1} parent=11 // pred_check
          %p147 = pneg %p64
        $region14: #{neural_network_forward.1} parent=11 // pred_check_branch
          %149 = sbr.rel (%p147) target = $region16
        $region15: #{neural_network_forward.1} parent=11 // pred_region
          %151 = vsyncadd [#allocation6], 0
          %s152 = sshll.u32 %s1, 4
          %s153 = int_to_ptr.hbm [resolvable:$true] %s152
          %s154 = sshll.u32 [#allocation5], 4
          %s155 = int_to_ptr.vmem [resolvable:$true] %s154
          %160 = dma.hbm_to_vmem [thread:$0]  %s153, 6272, %s155, [#allocation6], 64, 64, 4
        $region16: #{neural_network_forward.1} parent=11 // pred_fallthru
          _
        // Predicated region
        $region17: #{neural_network_forward.1} parent=11 // pred_check
          %p161 = pneg %p85
        $region18: #{neural_network_forward.1} parent=11 // pred_check_branch
          %163 = sbr.rel (%p161) target = $region20
        $region19: #{neural_network_forward.1} parent=11 // pred_region
          %165 = vsyncadd [#allocation6], 0
          %s166 = sshll.u32 %s2, 4
          %s167 = int_to_ptr.hbm [resolvable:$true] %s166
          %s168 = sshll.u32 [#allocation7], 4
          %s169 = int_to_ptr.vmem [resolvable:$true] %s168
          %174 = dma.hbm_to_vmem [thread:$0]  %s167, 1024, %s169, [#allocation6], 64, 64, 4
        $region20: #{neural_network_forward.1} parent=11 // pred_fallthru
          _
        // Predicated region
        $region21: #{neural_network_forward.1} parent=11 // pred_check
          %p175 = pneg %p106
        $region22: #{neural_network_forward.1} parent=11 // pred_check_branch
          %177 = sbr.rel (%p175) target = $region24
        $region23: #{neural_network_forward.1} parent=11 // pred_region
          _
        $region24: #{neural_network_forward.1} parent=11 // pred_fallthru
          _
      $region12: #{neural_network_forward.1} parent=5 // pred_fallthru
        _
      %p178 = scmp.lt.s32.totalorder %s17, 2
      // Predicated region
      $region25: #{neural_network_forward.1} parent=5 // pred_check
        %p179 = pneg %p178
      $region26: #{neural_network_forward.1} parent=5 // pred_check_branch
        %181 = sbr.rel (%p179) target = $region28
      $region27: #{neural_network_forward.1} parent=5 // pred_region
        // Predicated region
        $region29: #{neural_network_forward.1} parent=27 // pred_check
          %p182 = pneg %p37
        $region30: #{neural_network_forward.1} parent=27 // pred_check_branch
          %184 = sbr.rel (%p182) target = $region32
        $region31: #{neural_network_forward.1} parent=27 // pred_region
          %s185 = sand.u32 %s27, 1
          %s186 = scalar_lea.sflag [#allocation3], %s185
          %s187 = sand.u32 %s27, 1
          %s188 = smul.addr %s187, 56
          %s189 = scalar_lea.vmem [#allocation2], %s188
          %191 = vsyncadd %s186, 0
          %s192 = smul.addr %s17, 7
          %s193 = smul.addr %s192, 8
          %s194 = scalar_lea.hbm %s0, %s193
          %s196 = sshll.u32 %s194, 4
          %s197 = int_to_ptr.hbm [resolvable:$true] %s196
          %s198 = sshll.u32 %s189, 4
          %s199 = int_to_ptr.vmem [resolvable:$true] %s198
          %201 = dma.hbm_to_vmem [thread:$0]  %s197, 896, %s199, %s186
        $region32: #{neural_network_forward.1} parent=27 // pred_fallthru
          _
      $region28: #{neural_network_forward.1} parent=5 // pred_fallthru
        _
      %p202 = scmp.le.s32.totalorder 1, %s17
      %p203 = scmp.lt.s32.totalorder %s17, 3
      %p204 = pnand %p202, %p203
      %p205 = pneg %p204
      // Predicated region
      $region33: #{neural_network_forward.1} parent=5 // pred_check
        _
      $region34: #{neural_network_forward.1} parent=5 // pred_check_branch
        %207 = sbr.rel (%p204) target = $region36
      $region35: #{neural_network_forward.1} parent=5 // pred_region
        %s208 = ssub.s32 %s17, 1
        %s209 = sand.u32 %s30, 1
        %s210 = scalar_lea.sflag [#allocation3], %s209
        %s211 = sand.u32 %s30, 1
        %s212 = smul.addr %s211, 56
        %s213 = scalar_lea.vmem [#allocation2], %s212
        // Predicated region
        $region37: #{neural_network_forward.1} parent=35 // pred_check
          %p214 = pneg %p43
        $region38: #{neural_network_forward.1} parent=35 // pred_check_branch
          %216 = sbr.rel (%p214) target = $region40
        $region39: #{neural_network_forward.1} parent=35 // pred_region
          %218 = dma.done %s210, 896
        $region40: #{neural_network_forward.1} parent=35 // pred_fallthru
          _
        // Predicated region
        $region41: #{neural_network_forward.1} parent=35 // pred_check
          %p219 = pneg %p64
        $region42: #{neural_network_forward.1} parent=35 // pred_check_branch
          %221 = sbr.rel (%p219) target = $region44
        $region43: #{neural_network_forward.1} parent=35 // pred_region
          %223 = dma.done [#allocation6], 6272
        $region44: #{neural_network_forward.1} parent=35 // pred_fallthru
          _
        // Predicated region
        $region45: #{neural_network_forward.1} parent=35 // pred_check
          %p224 = pneg %p85
        $region46: #{neural_network_forward.1} parent=35 // pred_check_branch
          %226 = sbr.rel (%p224) target = $region48
        $region47: #{neural_network_forward.1} parent=35 // pred_region
          %228 = dma.done [#allocation6], 1024
        $region48: #{neural_network_forward.1} parent=35 // pred_fallthru
          _
        %s229 = sand.u32 %s30, 1
        %s230 = scalar_lea.sflag [#allocation3], %s229
        %s231 = sand.u32 %s30, 1
        %s232 = smul.addr %s231, 56
        %s233 = scalar_lea.vmem [#allocation2], %s232
        %p234 = pneg %p43
        %p235 = pneg %p40
        %p236 = pneg %p64
        %p237 = pneg %p61
        %p238 = pneg %p85
        %p239 = pneg %p82
        %p240 = pneg %p106
        %p241 = pneg %p103
        %p242 = pneg %p132
        %p243 = pneg %p129
        %s244 = sand.u32 %s119, 1
        %s245 = scalar_lea.sflag [#allocation4], %s244
        %s246 = sand.u32 %s119, 1
        %s247 = smul.addr %s246, 8
        %s248 = scalar_lea.vmem [#allocation8], %s247
        %v250 = vld [vmem:[%s3] sm:$0x3]
        %v251 = vld [vmem:[%s213] sm:$0xff]
        %v252 = vld [vmem:[%s213 + $0x8] sm:$0xff]
        %v253 = vld [vmem:[%s213 + $0x10] sm:$0xff]
        %v254 = vld [vmem:[%s213 + $0x18] sm:$0xff]
        %v255 = vld [vmem:[%s213 + $0x20] sm:$0xff]
        %v256 = vld [vmem:[%s213 + $0x28] sm:$0xff]
        %v257 = vld [vmem:[%s213 + $0x30] sm:$0xff]
        %v258 = vpack.c.bf16 %v251, %v251
        %v259 = vpack.c.bf16 %v252, %v252
        %v260 = vpack.c.bf16 %v253, %v253
        %v261 = vpack.c.bf16 %v254, %v254
        %v262 = vpack.c.bf16 %v255, %v255
        %v263 = vpack.c.bf16 %v256, %v256
        %v264 = vpack.c.bf16 %v257, %v257
        %v265 = vld [vmem:[#allocation5] sm:$0xf]
        %v266 = vld [vmem:[#allocation5 + $0x4] sm:$0xf]
        %v267 = vld [vmem:[#allocation5 + $0x8] sm:$0xf]
        %v268 = vld [vmem:[#allocation5 + $0xc] sm:$0xf]
        %v269 = vld [vmem:[#allocation5 + $0x10] sm:$0xf]
        %v270 = vld [vmem:[#allocation5 + $0x14] sm:$0xf]
        %v271 = vld [vmem:[#allocation5 + $0x18] sm:$0xf]
        %v272 = vld [vmem:[#allocation5 + $0x1c] sm:$0xf]
        %v273 = vld [vmem:[#allocation5 + $0x20] sm:$0xf]
        %v274 = vld [vmem:[#allocation5 + $0x24] sm:$0xf]
        %v275 = vld [vmem:[#allocation5 + $0x28] sm:$0xf]
        %v276 = vld [vmem:[#allocation5 + $0x2c] sm:$0xf]
        %v277 = vld [vmem:[#allocation5 + $0x30] sm:$0xf]
        %v278 = vld [vmem:[#allocation5 + $0x34] sm:$0xf]
        %v279 = vld [vmem:[#allocation5 + $0x38] sm:$0xf]
        %v280 = vld [vmem:[#allocation5 + $0x3c] sm:$0xf]
        %v281 = vld [vmem:[#allocation5 + $0x40] sm:$0xf]
        %v282 = vld [vmem:[#allocation5 + $0x44] sm:$0xf]
        %v283 = vld [vmem:[#allocation5 + $0x48] sm:$0xf]
        %v284 = vld [vmem:[#allocation5 + $0x4c] sm:$0xf]
        %v285 = vld [vmem:[#allocation5 + $0x50] sm:$0xf]
        %v286 = vld [vmem:[#allocation5 + $0x54] sm:$0xf]
        %v287 = vld [vmem:[#allocation5 + $0x58] sm:$0xf]
        %v288 = vld [vmem:[#allocation5 + $0x5c] sm:$0xf]
        %v289 = vld [vmem:[#allocation5 + $0x60] sm:$0xf]
        %v290 = vld [vmem:[#allocation5 + $0x64] sm:$0xf]
        %v291 = vld [vmem:[#allocation5 + $0x68] sm:$0xf]
        %v292 = vld [vmem:[#allocation5 + $0x6c] sm:$0xf]
        %v293 = vld [vmem:[#allocation5 + $0x70] sm:$0xf]
        %v294 = vld [vmem:[#allocation5 + $0x74] sm:$0xf]
        %v295 = vld [vmem:[#allocation5 + $0x78] sm:$0xf]
        %v296 = vld [vmem:[#allocation5 + $0x7c] sm:$0xf]
        %v297 = vld [vmem:[#allocation5 + $0x80] sm:$0xf]
        %v298 = vld [vmem:[#allocation5 + $0x84] sm:$0xf]
        %v299 = vld [vmem:[#allocation5 + $0x88] sm:$0xf]
        %v300 = vld [vmem:[#allocation5 + $0x8c] sm:$0xf]
        %v301 = vld [vmem:[#allocation5 + $0x90] sm:$0xf]
        %v302 = vld [vmem:[#allocation5 + $0x94] sm:$0xf]
        %v303 = vld [vmem:[#allocation5 + $0x98] sm:$0xf]
        %v304 = vld [vmem:[#allocation5 + $0x9c] sm:$0xf]
        %v305 = vld [vmem:[#allocation5 + $0xa0] sm:$0xf]
        %v306 = vld [vmem:[#allocation5 + $0xa4] sm:$0xf]
        %v307 = vld [vmem:[#allocation5 + $0xa8] sm:$0xf]
        %v308 = vld [vmem:[#allocation5 + $0xac] sm:$0xf]
        %v309 = vld [vmem:[#allocation5 + $0xb0] sm:$0xf]
        %v310 = vld [vmem:[#allocation5 + $0xb4] sm:$0xf]
        %v311 = vld [vmem:[#allocation5 + $0xb8] sm:$0xf]
        %v312 = vld [vmem:[#allocation5 + $0xbc] sm:$0xf]
        %v313 = vld [vmem:[#allocation5 + $0xc0] sm:$0xf]
        %v314 = vld [vmem:[#allocation5 + $0xc4] sm:$0xf]
        %v315 = vld [vmem:[#allocation5 + $0xc8] sm:$0xf]
        %v316 = vld [vmem:[#allocation5 + $0xcc] sm:$0xf]
        %v317 = vld [vmem:[#allocation5 + $0xd0] sm:$0xf]
        %v318 = vld [vmem:[#allocation5 + $0xd4] sm:$0xf]
        %v319 = vld [vmem:[#allocation5 + $0xd8] sm:$0xf]
        %v320 = vld [vmem:[#allocation5 + $0xdc] sm:$0xf]
        %v321 = vld [vmem:[#allocation5 + $0xe0] sm:$0xf]
        %v322 = vld [vmem:[#allocation5 + $0xe4] sm:$0xf]
        %v323 = vld [vmem:[#allocation5 + $0xe8] sm:$0xf]
        %v324 = vld [vmem:[#allocation5 + $0xec] sm:$0xf]
        %v325 = vld [vmem:[#allocation5 + $0xf0] sm:$0xf]
        %v326 = vld [vmem:[#allocation5 + $0xf4] sm:$0xf]
        %v327 = vld [vmem:[#allocation5 + $0xf8] sm:$0xf]
        %v328 = vld [vmem:[#allocation5 + $0xfc] sm:$0xf]
        %v329 = vld [vmem:[#allocation5 + $0x100] sm:$0xf]
        %v330 = vld [vmem:[#allocation5 + $0x104] sm:$0xf]
        %v331 = vld [vmem:[#allocation5 + $0x108] sm:$0xf]
        %v332 = vld [vmem:[#allocation5 + $0x10c] sm:$0xf]
        %v333 = vld [vmem:[#allocation5 + $0x110] sm:$0xf]
        %v334 = vld [vmem:[#allocation5 + $0x114] sm:$0xf]
        %v335 = vld [vmem:[#allocation5 + $0x118] sm:$0xf]
        %v336 = vld [vmem:[#allocation5 + $0x11c] sm:$0xf]
        %v337 = vld [vmem:[#allocation5 + $0x120] sm:$0xf]
        %v338 = vld [vmem:[#allocation5 + $0x124] sm:$0xf]
        %v339 = vld [vmem:[#allocation5 + $0x128] sm:$0xf]
        %v340 = vld [vmem:[#allocation5 + $0x12c] sm:$0xf]
        %v341 = vld [vmem:[#allocation5 + $0x130] sm:$0xf]
        %v342 = vld [vmem:[#allocation5 + $0x134] sm:$0xf]
        %v343 = vld [vmem:[#allocation5 + $0x138] sm:$0xf]
        %v344 = vld [vmem:[#allocation5 + $0x13c] sm:$0xf]
        %v345 = vld [vmem:[#allocation5 + $0x140] sm:$0xf]
        %v346 = vld [vmem:[#allocation5 + $0x144] sm:$0xf]
        %v347 = vld [vmem:[#allocation5 + $0x148] sm:$0xf]
        %v348 = vld [vmem:[#allocation5 + $0x14c] sm:$0xf]
        %v349 = vld [vmem:[#allocation5 + $0x150] sm:$0xf]
        %v350 = vld [vmem:[#allocation5 + $0x154] sm:$0xf]
        %v351 = vld [vmem:[#allocation5 + $0x158] sm:$0xf]
        %v352 = vld [vmem:[#allocation5 + $0x15c] sm:$0xf]
        %v353 = vld [vmem:[#allocation5 + $0x160] sm:$0xf]
        %v354 = vld [vmem:[#allocation5 + $0x164] sm:$0xf]
        %v355 = vld [vmem:[#allocation5 + $0x168] sm:$0xf]
        %v356 = vld [vmem:[#allocation5 + $0x16c] sm:$0xf]
        %v357 = vld [vmem:[#allocation5 + $0x170] sm:$0xf]
        %v358 = vld [vmem:[#allocation5 + $0x174] sm:$0xf]
        %v359 = vld [vmem:[#allocation5 + $0x178] sm:$0xf]
        %v360 = vld [vmem:[#allocation5 + $0x17c] sm:$0xf]
        %v361 = vld [vmem:[#allocation5 + $0x180] sm:$0xf]
        %v362 = vld [vmem:[#allocation5 + $0x184] sm:$0xf]
        %v363 = vperm.slane %v250, 0
        %v462 = vunpack.c.l.b16 %v265
        %v463 = vunpack.c.l.b16 %v266
        %v464 = vunpack.c.l.b16 %v267
        %v465 = vunpack.c.l.b16 %v268
        %v466 = vunpack.c.l.b16 %v269
        %v467 = vunpack.c.l.b16 %v270
        %v468 = vunpack.c.l.b16 %v271
        %v469 = vunpack.c.l.b16 %v272
        %v470 = vunpack.c.l.b16 %v273
        %v471 = vunpack.c.l.b16 %v274
        %v472 = vunpack.c.l.b16 %v275
        %v473 = vunpack.c.l.b16 %v276
        %v474 = vunpack.c.l.b16 %v277
        %v475 = vunpack.c.l.b16 %v278
        %v476 = vunpack.c.l.b16 %v279
        %v477 = vunpack.c.l.b16 %v280
        %v478 = vunpack.c.l.b16 %v281
        %v479 = vunpack.c.l.b16 %v282
        %v480 = vunpack.c.l.b16 %v283
        %v481 = vunpack.c.l.b16 %v284
        %v482 = vunpack.c.l.b16 %v285
        %v483 = vunpack.c.l.b16 %v286
        %v484 = vunpack.c.l.b16 %v287
        %v485 = vunpack.c.l.b16 %v288
        %v486 = vunpack.c.l.b16 %v289
        %v487 = vunpack.c.l.b16 %v290
        %v488 = vunpack.c.l.b16 %v291
        %v489 = vunpack.c.l.b16 %v292
        %v490 = vunpack.c.l.b16 %v293
        %v491 = vunpack.c.l.b16 %v294
        %v492 = vunpack.c.l.b16 %v295
        %v493 = vunpack.c.l.b16 %v296
        %v494 = vunpack.c.l.b16 %v297
        %v495 = vunpack.c.l.b16 %v298
        %v496 = vunpack.c.l.b16 %v299
        %v497 = vunpack.c.l.b16 %v300
        %v498 = vunpack.c.l.b16 %v301
        %v499 = vunpack.c.l.b16 %v302
        %v500 = vunpack.c.l.b16 %v303
        %v501 = vunpack.c.l.b16 %v304
        %v502 = vunpack.c.l.b16 %v305
        %v503 = vunpack.c.l.b16 %v306
        %v504 = vunpack.c.l.b16 %v307
        %v505 = vunpack.c.l.b16 %v308
        %v506 = vunpack.c.l.b16 %v309
        %v507 = vunpack.c.l.b16 %v310
        %v508 = vunpack.c.l.b16 %v311
        %v509 = vunpack.c.l.b16 %v312
        %v510 = vunpack.c.l.b16 %v313
        %v511 = vunpack.c.l.b16 %v314
        %v512 = vunpack.c.l.b16 %v315
        %v513 = vunpack.c.l.b16 %v316
        %v514 = vunpack.c.l.b16 %v317
        %v515 = vunpack.c.l.b16 %v318
        %v516 = vunpack.c.l.b16 %v319
        %v517 = vunpack.c.l.b16 %v320
        %v518 = vunpack.c.l.b16 %v321
        %v519 = vunpack.c.l.b16 %v322
        %v520 = vunpack.c.l.b16 %v323
        %v521 = vunpack.c.l.b16 %v324
        %v522 = vunpack.c.l.b16 %v325
        %v523 = vunpack.c.l.b16 %v326
        %v524 = vunpack.c.l.b16 %v327
        %v525 = vunpack.c.l.b16 %v328
        %v526 = vunpack.c.l.b16 %v329
        %v527 = vunpack.c.l.b16 %v330
        %v528 = vunpack.c.l.b16 %v331
        %v529 = vunpack.c.l.b16 %v332
        %v530 = vunpack.c.l.b16 %v333
        %v531 = vunpack.c.l.b16 %v334
        %v532 = vunpack.c.l.b16 %v335
        %v533 = vunpack.c.l.b16 %v336
        %v534 = vunpack.c.l.b16 %v337
        %v535 = vunpack.c.l.b16 %v338
        %v536 = vunpack.c.l.b16 %v339
        %v537 = vunpack.c.l.b16 %v340
        %v538 = vunpack.c.l.b16 %v341
        %v539 = vunpack.c.l.b16 %v342
        %v540 = vunpack.c.l.b16 %v343
        %v541 = vunpack.c.l.b16 %v344
        %v542 = vunpack.c.l.b16 %v345
        %v543 = vunpack.c.l.b16 %v346
        %v544 = vunpack.c.l.b16 %v347
        %v545 = vunpack.c.l.b16 %v348
        %v546 = vunpack.c.l.b16 %v349
        %v547 = vunpack.c.l.b16 %v350
        %v548 = vunpack.c.l.b16 %v351
        %v549 = vunpack.c.l.b16 %v352
        %v550 = vunpack.c.l.b16 %v353
        %v551 = vunpack.c.l.b16 %v354
        %v552 = vunpack.c.l.b16 %v355
        %v553 = vunpack.c.l.b16 %v356
        %v554 = vunpack.c.l.b16 %v357
        %v555 = vunpack.c.l.b16 %v358
        %v556 = vunpack.c.l.b16 %v359
        %v557 = vunpack.c.l.b16 %v360
        %v558 = vunpack.c.l.b16 %v361
        %v559 = vunpack.c.l.b16 %v362
        %v560 = vpack.c.b16 %v463, %v462
        %v561 = vpack.c.b16 %v465, %v464
        %v562 = vpack.c.b16 %v467, %v466
        %v563 = vpack.c.b16 %v469, %v468
        %v564 = vpack.c.b16 %v471, %v470
        %v565 = vpack.c.b16 %v473, %v472
        %v566 = vpack.c.b16 %v475, %v474
        %v567 = vpack.c.b16 %v477, %v476
        %v568 = vpack.c.b16 %v479, %v478
        %v569 = vpack.c.b16 %v481, %v480
        %v570 = vpack.c.b16 %v483, %v482
        %v571 = vpack.c.b16 %v485, %v484
        %v572 = vpack.c.b16 %v487, %v486
        %v573 = vpack.c.b16 %v489, %v488
        %v574 = vpack.c.b16 %v491, %v490
        %v575 = vpack.c.b16 %v493, %v492
        %v576 = vpack.c.b16 %v495, %v494
        %v577 = vpack.c.b16 %v497, %v496
        %v578 = vpack.c.b16 %v499, %v498
        %v579 = vpack.c.b16 %v501, %v500
        %v580 = vpack.c.b16 %v503, %v502
        %v581 = vpack.c.b16 %v505, %v504
        %v582 = vpack.c.b16 %v507, %v506
        %v583 = vpack.c.b16 %v509, %v508
        %v584 = vpack.c.b16 %v511, %v510
        %v585 = vpack.c.b16 %v513, %v512
        %v586 = vpack.c.b16 %v515, %v514
        %v587 = vpack.c.b16 %v517, %v516
        %v588 = vpack.c.b16 %v519, %v518
        %v589 = vpack.c.b16 %v521, %v520
        %v590 = vpack.c.b16 %v523, %v522
        %v591 = vpack.c.b16 %v525, %v524
        %v592 = vpack.c.b16 %v527, %v526
        %v593 = vpack.c.b16 %v529, %v528
        %v594 = vpack.c.b16 %v531, %v530
        %v595 = vpack.c.b16 %v533, %v532
        %v596 = vpack.c.b16 %v535, %v534
        %v597 = vpack.c.b16 %v537, %v536
        %v598 = vpack.c.b16 %v539, %v538
        %v599 = vpack.c.b16 %v541, %v540
        %v600 = vpack.c.b16 %v543, %v542
        %v601 = vpack.c.b16 %v545, %v544
        %v602 = vpack.c.b16 %v547, %v546
        %v603 = vpack.c.b16 %v549, %v548
        %v604 = vpack.c.b16 %v551, %v550
        %v605 = vpack.c.b16 %v553, %v552
        %v606 = vpack.c.b16 %v555, %v554
        %v607 = vpack.c.b16 %v557, %v556
        %v608 = vpack.c.b16 %v559, %v558
        %vm658 = vcmask 130048
        %v660 = vsel %vm658, %v264, 0
        %662 = vmatpush.bf16.msra.mxu0 %v567
        %663 = vmatpush.bf16.msra.mxu0 %v566
        %664 = vmatpush.bf16.msra.mxu0 %v565
        %665 = vmatpush.bf16.msra.mxu0 %v564
        %666 = vmatpush.bf16.msra.mxu0 %v563
        %667 = vmatpush.bf16.msra.mxu0 %v562
        %668 = vmatpush.bf16.msra.mxu0 %v561
        %669 = vmatpush.bf16.msra.mxu0 %v560
        %670 = vmatmul.bf16.gmra.mxu0 %v258
        %v671 = vpop.f32.mrf.mxu0
        %v672 = vadd.f32 %v363, %v671
        %v673 = vpop.f32.mrf.mxu0
        %674 = vdwg.mxu0
        %675 = vmatpush.bf16.msra.mxu0 %v575
        %676 = vmatpush.bf16.msra.mxu0 %v574
        %677 = vmatpush.bf16.msra.mxu0 %v573
        %678 = vmatpush.bf16.msra.mxu0 %v572
        %679 = vmatpush.bf16.msra.mxu0 %v571
        %680 = vmatpush.bf16.msra.mxu0 %v570
        %681 = vmatpush.bf16.msra.mxu0 %v569
        %682 = vmatpush.bf16.msra.mxu0 %v568
        %683 = vmatmul.bf16.gmra.mxu0 %v259
        %v684 = vpop.f32.mrf.mxu0
        %v685 = vadd.f32 %v672, %v684
        %v686 = vpop.f32.mrf.mxu0
        %687 = vdwg.mxu0
        %688 = vmatpush.bf16.msra.mxu0 %v583
        %689 = vmatpush.bf16.msra.mxu0 %v582
        %690 = vmatpush.bf16.msra.mxu0 %v581
        %691 = vmatpush.bf16.msra.mxu0 %v580
        %692 = vmatpush.bf16.msra.mxu0 %v579
        %693 = vmatpush.bf16.msra.mxu0 %v578
        %694 = vmatpush.bf16.msra.mxu0 %v577
        %695 = vmatpush.bf16.msra.mxu0 %v576
        %696 = vmatmul.bf16.gmra.mxu0 %v260
        %v697 = vpop.f32.mrf.mxu0
        %v698 = vadd.f32 %v685, %v697
        %v699 = vpop.f32.mrf.mxu0
        %700 = vdwg.mxu0
        %701 = vmatpush.bf16.msra.mxu0 %v591
        %702 = vmatpush.bf16.msra.mxu0 %v590
        %703 = vmatpush.bf16.msra.mxu0 %v589
        %704 = vmatpush.bf16.msra.mxu0 %v588
        %705 = vmatpush.bf16.msra.mxu0 %v587
        %706 = vmatpush.bf16.msra.mxu0 %v586
        %707 = vmatpush.bf16.msra.mxu0 %v585
        %708 = vmatpush.bf16.msra.mxu0 %v584
        %709 = vmatmul.bf16.gmra.mxu0 %v261
        %v710 = vpop.f32.mrf.mxu0
        %v711 = vadd.f32 %v698, %v710
        %v712 = vpop.f32.mrf.mxu0
        %713 = vdwg.mxu0
        %714 = vmatpush.bf16.msra.mxu0 %v599
        %715 = vmatpush.bf16.msra.mxu0 %v598
        %716 = vmatpush.bf16.msra.mxu0 %v597
        %717 = vmatpush.bf16.msra.mxu0 %v596
        %718 = vmatpush.bf16.msra.mxu0 %v595
        %719 = vmatpush.bf16.msra.mxu0 %v594
        %720 = vmatpush.bf16.msra.mxu0 %v593
        %721 = vmatpush.bf16.msra.mxu0 %v592
        %722 = vmatmul.bf16.gmra.mxu0 %v262
        %v723 = vpop.f32.mrf.mxu0
        %v724 = vadd.f32 %v711, %v723
        %v725 = vpop.f32.mrf.mxu0
        %726 = vdwg.mxu0
        %727 = vmatpush.bf16.msra.mxu0 %v607
        %728 = vmatpush.bf16.msra.mxu0 %v606
        %729 = vmatpush.bf16.msra.mxu0 %v605
        %730 = vmatpush.bf16.msra.mxu0 %v604
        %731 = vmatpush.bf16.msra.mxu0 %v603
        %732 = vmatpush.bf16.msra.mxu0 %v602
        %733 = vmatpush.bf16.msra.mxu0 %v601
        %734 = vmatpush.bf16.msra.mxu0 %v600
        %735 = vmatmul.bf16.gmra.mxu0 %v263
        %v736 = vpop.f32.mrf.mxu0
        %v737 = vadd.f32 %v724, %v736
        %v738 = vpop.f32.mrf.mxu0
        %739 = vdwg.mxu0
        %740 = vmatpush.bf16.msra.mxu0 0
        %741 = vmatpush.bf16.msra.mxu0 0
        %742 = vmatpush.bf16.msra.mxu0 0
        %743 = vmatpush.bf16.msra.mxu0 0
        %744 = vmatpush.bf16.msra.mxu0 0
        %745 = vmatpush.bf16.msra.mxu0 0
        %746 = vmatpush.bf16.msra.mxu0 0
        %747 = vmatpush.bf16.msra.mxu0 %v608
        %748 = vmatmul.bf16.gmra.mxu0 %v660
        %v749 = vpop.f32.mrf.mxu0
        %v750 = vadd.f32 %v737, %v749
        %v751 = vpop.f32.mrf.mxu0
        %752 = vdwg.mxu0
        %v753 = vmax.f32 %v750, 0.0
        %v754 = vpack.c.bf16 %v753, %v753
        %v755 = vld [vmem:[#allocation7] sm:$0xf]
        %v756 = vld [vmem:[#allocation7 + $0x4] sm:$0xf]
        %v757 = vld [vmem:[#allocation7 + $0x8] sm:$0xf]
        %v758 = vld [vmem:[#allocation7 + $0xc] sm:$0xf]
        %v759 = vld [vmem:[#allocation7 + $0x10] sm:$0xf]
        %v760 = vld [vmem:[#allocation7 + $0x14] sm:$0xf]
        %v761 = vld [vmem:[#allocation7 + $0x18] sm:$0xf]
        %v762 = vld [vmem:[#allocation7 + $0x1c] sm:$0xf]
        %v763 = vld [vmem:[#allocation7 + $0x20] sm:$0xf]
        %v764 = vld [vmem:[#allocation7 + $0x24] sm:$0xf]
        %v765 = vld [vmem:[#allocation7 + $0x28] sm:$0xf]
        %v766 = vld [vmem:[#allocation7 + $0x2c] sm:$0xf]
        %v767 = vld [vmem:[#allocation7 + $0x30] sm:$0xf]
        %v768 = vld [vmem:[#allocation7 + $0x34] sm:$0xf]
        %v769 = vld [vmem:[#allocation7 + $0x38] sm:$0xf]
        %v770 = vld [vmem:[#allocation7 + $0x3c] sm:$0xf]
        %v787 = vunpack.c.l.b16 %v755
        %v788 = vunpack.c.l.b16 %v756
        %v789 = vunpack.c.l.b16 %v757
        %v790 = vunpack.c.l.b16 %v758
        %v791 = vunpack.c.l.b16 %v759
        %v792 = vunpack.c.l.b16 %v760
        %v793 = vunpack.c.l.b16 %v761
        %v794 = vunpack.c.l.b16 %v762
        %v795 = vunpack.c.l.b16 %v763
        %v796 = vunpack.c.l.b16 %v764
        %v797 = vunpack.c.l.b16 %v765
        %v798 = vunpack.c.l.b16 %v766
        %v799 = vunpack.c.l.b16 %v767
        %v800 = vunpack.c.l.b16 %v768
        %v801 = vunpack.c.l.b16 %v769
        %v802 = vunpack.c.l.b16 %v770
        %v803 = vpack.c.b16 %v788, %v787
        %v804 = vpack.c.b16 %v790, %v789
        %v805 = vpack.c.b16 %v792, %v791
        %v806 = vpack.c.b16 %v794, %v793
        %v807 = vpack.c.b16 %v796, %v795
        %v808 = vpack.c.b16 %v798, %v797
        %v809 = vpack.c.b16 %v800, %v799
        %v810 = vpack.c.b16 %v802, %v801
        %819 = vmatpush.bf16.msra.mxu0 %v810
        %820 = vmatpush.bf16.msra.mxu0 %v809
        %821 = vmatpush.bf16.msra.mxu0 %v808
        %822 = vmatpush.bf16.msra.mxu0 %v807
        %823 = vmatpush.bf16.msra.mxu0 %v806
        %824 = vmatpush.bf16.msra.mxu0 %v805
        %825 = vmatpush.bf16.msra.mxu0 %v804
        %826 = vmatpush.bf16.msra.mxu0 %v803
        %827 = vmatmul.bf16.gmra.mxu0 %v754
        %v828 = vpop.f32.mrf.mxu0
        %v829 = vadd.f32 0.0, %v828
        %v830 = vpop.f32.mrf.mxu0
        %831 = vdwg.mxu0
        %v832 = vperm.slane %v250, 1
        %v833 = vadd.f32 %v829, %v832
        %vm834 = vcmask 80896
        %835 = vst.msk [vmem:[%s248] sm:$0xff] %vm834, %v833
        %s836 = sand.u32 %s119, 1
        %s837 = scalar_lea.sflag [#allocation4], %s836
        %s838 = sand.u32 %s119, 1
        %s839 = smul.addr %s838, 8
        %s840 = scalar_lea.vmem [#allocation8], %s839
        // Predicated region
        $region49: #{neural_network_forward.1} parent=35 // pred_check
          %p841 = pneg %p129
        $region50: #{neural_network_forward.1} parent=35 // pred_check_branch
          %843 = sbr.rel (%p841) target = $region52
        $region51: #{neural_network_forward.1} parent=35 // pred_region
          %845 = vsyncadd %s837, 0
          %s846 = smul.addr %s22, 8
          %s847 = scalar_lea.hbm %s4, %s846
          %s849 = sshll.u32 %s840, 4
          %s850 = int_to_ptr.vmem [resolvable:$true] %s849
          %s851 = sshll.u32 %s847, 4
          %s852 = int_to_ptr.hbm [resolvable:$true] %s851
          %854 = dma.vmem_to_hbm [thread:$0]  %s850, 128, %s852, %s837
        $region52: #{neural_network_forward.1} parent=35 // pred_fallthru
          _
      $region36: #{neural_network_forward.1} parent=5 // pred_fallthru
        _
      %p855 = scmp.le.s32.totalorder 2, %s17
      // Predicated region
      $region53: #{neural_network_forward.1} parent=5 // pred_check
        %p856 = pneg %p855
      $region54: #{neural_network_forward.1} parent=5 // pred_check_branch
        %858 = sbr.rel (%p856) target = $region56
      $region55: #{neural_network_forward.1} parent=5 // pred_region
        %s859 = ssub.s32 %s17, 2
        // Predicated region
        $region57: #{neural_network_forward.1} parent=55 // pred_check
          %p860 = pneg %p135
        $region58: #{neural_network_forward.1} parent=55 // pred_check_branch
          %862 = sbr.rel (%p860) target = $region60
        $region59: #{neural_network_forward.1} parent=55 // pred_region
          %s863 = sand.u32 %s120, 1
          %s864 = scalar_lea.sflag [#allocation4], %s863
          %s865 = sand.u32 %s120, 1
          %s866 = smul.addr %s865, 8
          %s867 = scalar_lea.vmem [#allocation8], %s866
          %869 = dma.done %s864, 128
        $region60: #{neural_network_forward.1} parent=55 // pred_fallthru
          _
      $region56: #{neural_network_forward.1} parent=5 // pred_fallthru
        _
    $region6: #{neural_network_forward.1} parent=1 // loop_footer
      %s21 = sadd.s32 1, %s17
    $region7: #{neural_network_forward.1} parent=1 // loop_footer_branch
      %16 = sbr.rel target = $region3
    $region8: #{neural_network_forward.1} parent=1 // loop_exit
      _
    %870 = vsyncpa [#allocation3], 1
    %s871 = scalar_lea.sflag [#allocation3], 1
    %872 = vsyncpa %s871, 1
    %873 = vsyncpa [#allocation6], 1
    %874 = vsyncpa [#allocation4], 1
    %s875 = scalar_lea.sflag [#allocation4], 1
    %876 = vsyncpa %s875, 1

</llo_original>
